<compile_context>
chip_gen: v7x
topology: tpu7x:2x2x1
jax: 0.10.0
libtpu: 0.0.40
codegen_flags: <defaults>
</compile_context>

<pallas_src>
import functools
import math

import jax
import jax.numpy as jnp
from jax import lax
from jax.experimental import pallas as pl
from jax.experimental.pallas import tpu as pltpu


def _rs_attention_kernel(x2_ref, wq_ref, k_ref, vd_ref, o_ref,
                         q_sc, m_sc, acc_sc, *, scale, bf16_exp):
    """One (batch, query-tile, key-block) grid step, channel-first layout.

    x2_ref : (C, TQ)    q source for this query tile (bf16, resident over keys)
    wq_ref : (C2, C)    q 1x1-conv weight (bf16, grid-invariant)
    k_ref  : (C2, KB)   key block (bf16)
    vd_ref : (C2r, KB)  value block with a ones row at index C2 (bf16); the
                        ones row fuses the softmax denominator into the PV dot.
    o_ref  : (C2, TQ)   output tile (PyTorch (B, C/2, N2) layout, lane-dense)
    q_sc   : (C2, TQ)   bf16 scratch: projected + scaled q (written at kb == 0)
    m_sc   : (1, TQ)    f32 scratch: running row max (online softmax)
    acc_sc : (C2r, TQ)  f32 scratch: running [PV ; denominator] accumulator
    """
    kb = pl.program_id(2)
    nk = pl.num_programs(2)
    C2 = o_ref.shape[0]

    @pl.when(kb == 0)
    def _():
        # q projection for this query tile; fold 1/sqrt(C) into q.
        q = lax.dot_general(
            wq_ref[...], x2_ref[...],
            dimension_numbers=(((1,), (0,)), ((), ())),
            preferred_element_type=jnp.float32)               # (C2, TQ) f32
        q_sc[...] = (q * scale).astype(jnp.bfloat16)
        m_sc[...] = jnp.full(m_sc.shape, -jnp.inf, dtype=m_sc.dtype)
        acc_sc[...] = jnp.zeros(acc_sc.shape, dtype=acc_sc.dtype)

    # energy^T for this key block: e[n, m] = sum_c k[c, n] q[c, m] -> (KB, TQ).
    e = lax.dot_general(
        k_ref[...], q_sc[...],
        dimension_numbers=(((0,), (0,)), ((), ())),
        preferred_element_type=jnp.float32)                   # (KB, TQ) f32

    # Online softmax: keys on the sublane axis => running max / rescale stay in
    # (1, TQ) row layout, no transposes needed.
    m_prev = m_sc[...]                                        # (1, TQ)
    m_new = jnp.maximum(m_prev, jnp.max(e, axis=0, keepdims=True))
    alpha = jnp.exp(m_prev - m_new)                           # (1, TQ) f32
    shifted = e - m_new                                       # (KB, TQ) f32
    if bf16_exp:
        p = jnp.exp(shifted.astype(jnp.bfloat16))             # bf16 EUP (v6e/v7x)
    else:
        p = jnp.exp(shifted).astype(jnp.bfloat16)             # f32 EUP (v5e)

    # Fused numerator + denominator: rows [0:C2] accumulate v @ p^T, row C2
    # (the ones row of vd) accumulates the softmax denominator.
    pv = lax.dot_general(
        vd_ref[...], p,
        dimension_numbers=(((1,), (0,)), ((), ())),
        preferred_element_type=jnp.float32)                   # (C2r, TQ) f32
    acc_sc[...] = acc_sc[...] * alpha + pv
    m_sc[...] = m_new

    @pl.when(kb == nk - 1)
    def _():
        acc = acc_sc[...]
        out = acc[:C2, :] * pl.reciprocal(acc[C2:C2 + 1, :], approx=True)
        o_ref[...] = out.astype(o_ref.dtype)


def _round_up(n, m):
    return ((n + m - 1) // m) * m


def _pick_tile(n, target):
    """Largest multiple-of-128 divisor of n (n itself a multiple of 128) <= target."""
    best = 128
    t = 256
    while t <= min(n, target):
        if n % t == 0:
            best = t
        t += 128
    return best


def _vmem_limit_bytes():
    # ~3/4 of physical VMEM (headroom; the blocked kernel needs far less).
    try:
        return int(pltpu.get_tpu_info().vmem_capacity_bytes) * 3 // 4
    except Exception:
        return 48 * 1024 * 1024


def _q_tile_target():
    # Larger q tiles on 128 MiB chips (v5e/v6e), smaller on v7x (64 MiB).
    try:
        cap = int(pltpu.get_tpu_info().vmem_capacity_bytes)
    except Exception:
        return 256
    return 512 if cap >= (96 << 20) else 256


def _use_bf16_exp():
    # bf16 EUP exists on v6e/v7x; keep the exponent in f32 on older chips.
    try:
        kind = jax.devices()[0].device_kind.lower()
    except Exception:
        return False
    return not any(t in kind for t in ("v2", "v3", "v4", "v5"))


def rs_attention(x1, x2, wk, wq, wv):
    """Pallas RSAttention forward (channel-first throughout).

    Args:
      x1: (B, C, N1) f32 - source of k and v.
      x2: (B, C, N2) f32 - source of q.
      wk, wq, wv: (C // 2, C) f32 - Conv1d(kernel_size=1, bias=False) weights.

    Returns:
      (B, C // 2, N2) f32 - same layout as the PyTorch module.
    """
    B, C, N1 = x1.shape
    B2, C_, N2 = x2.shape
    assert B2 == B and C_ == C
    C2 = wq.shape[0]

    # bf16 kernel inputs; f32 accumulation inside every dot.
    x1b = x1.astype(jnp.bfloat16)
    x2b = x2.astype(jnp.bfloat16)
    wkb = wk.astype(jnp.bfloat16)
    wqb = wq.astype(jnp.bfloat16)
    wvb = wv.astype(jnp.bfloat16)

    # k/v projection hoisted out of the attention kernel (tiny XLA bf16 matmul).
    k = jnp.einsum("oc,bcn->bon", wkb, x1b,
                   preferred_element_type=jnp.float32).astype(jnp.bfloat16)
    v = jnp.einsum("oc,bcn->bon", wvb, x1b,
                   preferred_element_type=jnp.float32).astype(jnp.bfloat16)

    # Pad key/query axes to multiples of 128.  Padded keys are exactly ignored
    # because both the padded v columns and the padded ones-row columns are 0.
    n1p = _round_up(N1, 128)
    n2p = _round_up(N2, 128)
    c2r = _round_up(C2 + 1, 8)          # v rows + ones row + zero pad rows

    k_p = jnp.pad(k, ((0, 0), (0, 0), (0, n1p - N1)))
    v_p = jnp.pad(v, ((0, 0), (0, 0), (0, n1p - N1)))
    ones_row = jnp.pad(jnp.ones((B, 1, N1), jnp.bfloat16),
                       ((0, 0), (0, 0), (0, n1p - N1)))
    vd = jnp.concatenate(
        [v_p, ones_row, jnp.zeros((B, c2r - C2 - 1, n1p), jnp.bfloat16)], axis=1)
    x2_p = jnp.pad(x2b, ((0, 0), (0, 0), (0, n2p - N2)))

    tq = _pick_tile(n2p, _q_tile_target())   # query tile
    tk = _pick_tile(n1p, 512)                # key block
    grid = (B, n2p // tq, n1p // tk)

    cost = pl.CostEstimate(
        flops=2 * B * (C2 * C * n2p + (C2 + c2r) * n1p * n2p),
        transcendentals=B * n2p * n1p,
        bytes_accessed=(x2_p.size + wqb.size + k_p.size + vd.size) * 2
                       + B * C2 * n2p * 4,
    )

    kernel = pl.pallas_call(
        functools.partial(_rs_attention_kernel,
                          scale=1.0 / math.sqrt(C),
                          bf16_exp=_use_bf16_exp()),
        out_shape=jax.ShapeDtypeStruct((B, C2, n2p), jnp.float32),
        grid_spec=pltpu.PrefetchScalarGridSpec(
            num_scalar_prefetch=0,
            grid=grid,
            in_specs=[
                # q source, tiled along the query axis; resident across key blocks.
                pl.BlockSpec((pl.Squeezed(), C, tq), lambda b, j, n: (b, 0, j)),
                # wq: grid-invariant, stays resident in VMEM.
                pl.BlockSpec((C2, C), lambda b, j, n: (0, 0)),
                # k and [v; ones; 0] blocks streamed along the key axis.
                pl.BlockSpec((pl.Squeezed(), C2, tk), lambda b, j, n: (b, 0, n)),
                pl.BlockSpec((pl.Squeezed(), c2r, tk), lambda b, j, n: (b, 0, n)),
            ],
            out_specs=pl.BlockSpec((pl.Squeezed(), C2, tq),
                                   lambda b, j, n: (b, 0, j)),
            scratch_shapes=[
                pltpu.VMEM((C2, tq), jnp.bfloat16),   # projected + scaled q
                pltpu.VMEM((1, tq), jnp.float32),     # running row max
                pltpu.VMEM((c2r, tq), jnp.float32),   # running [PV ; denom]
            ],
        ),
        compiler_params=pltpu.CompilerParams(
            dimension_semantics=("parallel", "parallel", "arbitrary"),
            vmem_limit_bytes=_vmem_limit_bytes(),
        ),
        cost_estimate=cost,
    )
    out = kernel(x2_p, wqb, k_p, vd)
    return out[:, :, :N2]


def _reference(x1, x2, wk, wq, wv):
    """Pure-JAX reference mirroring the PyTorch forward."""
    C = x1.shape[1]
    k = jnp.einsum("oc,bcn->bon", wk, x1)                      # (B, C2, N1)
    v = jnp.einsum("oc,bcn->bon", wv, x1)                      # (B, C2, N1)
    q = jnp.einsum("oc,bcm->bom", wq, x2)                      # (B, C2, N2)
    energy = jnp.einsum("bom,bon->bmn", q, k) / math.sqrt(C)   # (B, N2, N1)
    attn = jax.nn.softmax(energy, axis=-1)
    return jnp.einsum("bmn,bcn->bcm", attn, v)                 # (B, C2, N2)


if __name__ == "__main__":
    B, C, N1, N2 = 2, 16, 32, 16
    C2 = C // 2

    key = jax.random.PRNGKey(0)
    k_x1, k_x2, k_wk, k_wq, k_wv = jax.random.split(key, 5)

    x1 = jax.random.normal(k_x1, (B, C, N1), dtype=jnp.float32)
    x2 = jax.random.normal(k_x2, (B, C, N2), dtype=jnp.float32)

    # Conv1d(in=C, out=C//2, kernel_size=1, bias=False) weights, kernel dim squeezed.
    bound = 1.0 / math.sqrt(C)
    wk = jax.random.uniform(k_wk, (C2, C), jnp.float32, -bound, bound)
    wq = jax.random.uniform(k_wq, (C2, C), jnp.float32, -bound, bound)
    wv = jax.random.uniform(k_wv, (C2, C), jnp.float32, -bound, bound)

    out = jax.block_until_ready(rs_attention(x1, x2, wk, wq, wv))
    ref = jax.block_until_ready(_reference(x1, x2, wk, wq, wv))

    assert out.shape == (B, C2, N2), out.shape
    # bf16 operands (f32 accumulation), bf16 exp on newer chips, approx recip.
    assert jnp.allclose(out, ref, atol=5e-2, rtol=5e-2), float(
        jnp.max(jnp.abs(out - ref)))

    print("KERNEL_OK")
</pallas_src>

<mosaic_0001>
module attributes {stable_mosaic.version = 11 : i64} {
  func.func @_rs_attention_kernel(%arg0: i32, %arg1: i32, %arg2: i32, %arg3: memref<1x16x128xbf16, #tpu.memory_space<vmem>>, %arg4: memref<8x16xbf16, #tpu.memory_space<vmem>>, %arg5: memref<1x8x128xbf16, #tpu.memory_space<vmem>>, %arg6: memref<1x16x128xbf16, #tpu.memory_space<vmem>>, %arg7: memref<1x8x128xf32, #tpu.memory_space<vmem>>, %arg8: memref<8x128xbf16, #tpu.memory_space<vmem>>, %arg9: memref<1x128xf32, #tpu.memory_space<vmem>>, %arg10: memref<16x128xf32, #tpu.memory_space<vmem>>) attributes {dimension_semantics = [#tpu.dimension_semantics<parallel>, #tpu.dimension_semantics<parallel>, #tpu.dimension_semantics<arbitrary>], iteration_bounds = array<i64: 2, 1, 1>, scalar_prefetch = 0 : i64, scratch_operands = 3 : i64, tpu.core_type = #tpu.core_type<tc>, window_params = [{transform_indices = @transform_0, window_bounds = array<i64: 1, 16, 128>}, {pipeline_mode = #tpu.pipeline_mode<synchronous>, transform_indices = @transform_1, window_bounds = array<i64: 8, 16>}, {transform_indices = @transform_2, window_bounds = array<i64: 1, 8, 128>}, {transform_indices = @transform_3, window_bounds = array<i64: 1, 16, 128>}, {transform_indices = @transform_4, window_bounds = array<i64: 1, 8, 128>}]} {
    %c0_i32 = arith.constant 0 : i32
    %0 = arith.cmpi eq, %arg2, %c0_i32 : i32
    %1 = arith.extui %0 : i1 to i32
    %c0_i32_0 = arith.constant 0 : i32
    %2 = arith.cmpi ne, %1, %c0_i32_0 : i32
    scf.if %2 {
      %c0_20 = arith.constant 0 : index
      %c0_21 = arith.constant 0 : index
      %29 = vector.load %arg4[%c0_20, %c0_21] : memref<8x16xbf16, #tpu.memory_space<vmem>>, vector<8x16xbf16>
      %c0_22 = arith.constant 0 : index
      %c0_23 = arith.constant 0 : index
      %c0_24 = arith.constant 0 : index
      %30 = vector.load %arg3[%c0_22, %c0_23, %c0_24] : memref<1x16x128xbf16, #tpu.memory_space<vmem>>, vector<1x16x128xbf16>
      %31 = vector.shape_cast %30 : vector<1x16x128xbf16> to vector<16x128xbf16>
      %cst_25 = arith.constant dense<0.000000e+00> : vector<8x128xf32>
      %32 = tpu.matmul %29, %31, %cst_25 {dimension_numbers = #tpu.dot_dimension_numbers<[1], [0], [0], [1], [0, 0, 1, 1], [], []>} : vector<8x16xbf16>, vector<16x128xbf16>, vector<8x128xf32> -> vector<8x128xf32>
      %cst_26 = arith.constant 2.500000e-01 : f32
      %33 = vector.broadcast %cst_26 : f32 to vector<8x128xf32>
      %34 = arith.mulf %32, %33 : vector<8x128xf32>
      %35 = arith.truncf %34 : vector<8x128xf32> to vector<8x128xbf16>
      %c0_27 = arith.constant 0 : index
      %c0_28 = arith.constant 0 : index
      %36 = vector.load %arg8[%c0_27, %c0_28] : memref<8x128xbf16, #tpu.memory_space<vmem>>, vector<8x128xbf16>
      tpu.vector_store %arg8[%c0_27, %c0_28], %35 {strides = array<i32>} : memref<8x128xbf16, #tpu.memory_space<vmem>>, vector<8x128xbf16>,
      %cst_29 = arith.constant 0xFF800000 : f32
      %37 = vector.broadcast %cst_29 : f32 to vector<1x128xf32>
      %c0_30 = arith.constant 0 : index
      %c0_31 = arith.constant 0 : index
      %38 = vector.load %arg9[%c0_30, %c0_31] : memref<1x128xf32, #tpu.memory_space<vmem>>, vector<1x128xf32>
      tpu.vector_store %arg9[%c0_30, %c0_31], %37 {strides = array<i32>} : memref<1x128xf32, #tpu.memory_space<vmem>>, vector<1x128xf32>,
      %cst_32 = arith.constant 0.000000e+00 : f32
      %39 = vector.broadcast %cst_32 : f32 to vector<16x128xf32>
      %c0_33 = arith.constant 0 : index
      %c0_34 = arith.constant 0 : index
      %40 = vector.load %arg10[%c0_33, %c0_34] : memref<16x128xf32, #tpu.memory_space<vmem>>, vector<16x128xf32>
      tpu.vector_store %arg10[%c0_33, %c0_34], %39 {strides = array<i32>} : memref<16x128xf32, #tpu.memory_space<vmem>>, vector<16x128xf32>,
    } else {
    }
    %c0 = arith.constant 0 : index
    %c0_1 = arith.constant 0 : index
    %c0_2 = arith.constant 0 : index
    %3 = vector.load %arg5[%c0, %c0_1, %c0_2] : memref<1x8x128xbf16, #tpu.memory_space<vmem>>, vector<1x8x128xbf16>
    %4 = vector.shape_cast %3 : vector<1x8x128xbf16> to vector<8x128xbf16>
    %c0_3 = arith.constant 0 : index
    %c0_4 = arith.constant 0 : index
    %5 = vector.load %arg8[%c0_3, %c0_4] : memref<8x128xbf16, #tpu.memory_space<vmem>>, vector<8x128xbf16>
    %cst = arith.constant dense<0.000000e+00> : vector<128x128xf32>
    %6 = tpu.matmul %4, %5, %cst {dimension_numbers = #tpu.dot_dimension_numbers<[0], [0], [1], [1], [0, 1, 1, 1], [], []>} : vector<8x128xbf16>, vector<8x128xbf16>, vector<128x128xf32> -> vector<128x128xf32>
    %c0_5 = arith.constant 0 : index
    %c0_6 = arith.constant 0 : index
    %7 = vector.load %arg9[%c0_5, %c0_6] : memref<1x128xf32, #tpu.memory_space<vmem>>, vector<1x128xf32>
    %cst_7 = arith.constant dense<0xFF800000> : vector<128xf32>
    %8 = vector.multi_reduction <maximumf>, %6, %cst_7 [0] : vector<128x128xf32> to vector<128xf32>
    %9 = vector.shape_cast %8 : vector<128xf32> to vector<1x128xf32>
    %10 = arith.maximumf %7, %9 : vector<1x128xf32>
    %11 = arith.subf %7, %10 : vector<1x128xf32>
    %12 = math.exp %11 : vector<1x128xf32>
    %13 = vector.broadcast %10 : vector<1x128xf32> to vector<128x128xf32>
    %14 = arith.subf %6, %13 : vector<128x128xf32>
    %15 = arith.truncf %14 : vector<128x128xf32> to vector<128x128xbf16>
    %16 = math.exp %15 : vector<128x128xbf16>
    %c0_8 = arith.constant 0 : index
    %c0_9 = arith.constant 0 : index
    %c0_10 = arith.constant 0 : index
    %17 = vector.load %arg6[%c0_8, %c0_9, %c0_10] : memref<1x16x128xbf16, #tpu.memory_space<vmem>>, vector<1x16x128xbf16>
    %18 = vector.shape_cast %17 : vector<1x16x128xbf16> to vector<16x128xbf16>
    %cst_11 = arith.constant dense<0.000000e+00> : vector<16x128xf32>
    %19 = tpu.matmul %18, %16, %cst_11 {dimension_numbers = #tpu.dot_dimension_numbers<[1], [0], [0], [1], [0, 0, 1, 1], [], []>} : vector<16x128xbf16>, vector<128x128xbf16>, vector<16x128xf32> -> vector<16x128xf32>
    %c0_12 = arith.constant 0 : index
    %c0_13 = arith.constant 0 : index
    %20 = vector.load %arg10[%c0_12, %c0_13] : memref<16x128xf32, #tpu.memory_space<vmem>>, vector<16x128xf32>
    %21 = vector.broadcast %12 : vector<1x128xf32> to vector<16x128xf32>
    %22 = arith.mulf %20, %21 : vector<16x128xf32>
    %23 = arith.addf %22, %19 : vector<16x128xf32>
    %c0_14 = arith.constant 0 : index
    %c0_15 = arith.constant 0 : index
    %24 = vector.load %arg10[%c0_14, %c0_15] : memref<16x128xf32, #tpu.memory_space<vmem>>, vector<16x128xf32>
    tpu.vector_store %arg10[%c0_14, %c0_15], %23 {strides = array<i32>} : memref<16x128xf32, #tpu.memory_space<vmem>>, vector<16x128xf32>,
    %c0_16 = arith.constant 0 : index
    %c0_17 = arith.constant 0 : index
    %25 = vector.load %arg9[%c0_16, %c0_17] : memref<1x128xf32, #tpu.memory_space<vmem>>, vector<1x128xf32>
    tpu.vector_store %arg9[%c0_16, %c0_17], %10 {strides = array<i32>} : memref<1x128xf32, #tpu.memory_space<vmem>>, vector<1x128xf32>,
    %c0_i32_18 = arith.constant 0 : i32
    %26 = arith.cmpi eq, %arg2, %c0_i32_18 : i32
    %27 = arith.extui %26 : i1 to i32
    %c0_i32_19 = arith.constant 0 : i32
    %28 = arith.cmpi ne, %27, %c0_i32_19 : i32
    scf.if %28 {
      %c0_20 = arith.constant 0 : index
      %c0_21 = arith.constant 0 : index
      %29 = vector.load %arg10[%c0_20, %c0_21] : memref<16x128xf32, #tpu.memory_space<vmem>>, vector<16x128xf32>
      %30 = vector.extract_strided_slice %29 {offsets = [0, 0], sizes = [8, 128], strides = [1, 1]} : vector<16x128xf32> to vector<8x128xf32>
      %31 = vector.extract_strided_slice %29 {offsets = [8, 0], sizes = [1, 128], strides = [1, 1]} : vector<16x128xf32> to vector<1x128xf32>
      %32 = tpu.reciprocal %31 {approx = true} : vector<1x128xf32> -> vector<1x128xf32>
      %33 = vector.broadcast %32 : vector<1x128xf32> to vector<8x128xf32>
      %34 = arith.mulf %30, %33 : vector<8x128xf32>
      %c0_22 = arith.constant 0 : index
      %c0_23 = arith.constant 0 : index
      %c0_24 = arith.constant 0 : index
      %35 = vector.load %arg7[%c0_22, %c0_23, %c0_24] : memref<1x8x128xf32, #tpu.memory_space<vmem>>, vector<1x8x128xf32>
      %36 = vector.shape_cast %35 : vector<1x8x128xf32> to vector<8x128xf32>
      %37 = vector.shape_cast %34 : vector<8x128xf32> to vector<1x8x128xf32>
      tpu.vector_store %arg7[%c0_22, %c0_23, %c0_24], %37 {strides = array<i32>} : memref<1x8x128xf32, #tpu.memory_space<vmem>>, vector<1x8x128xf32>,
    } else {
    }
    return
  }
  func.func @transform_0(%arg0: i32, %arg1: i32, %arg2: i32) -> (i32, i32, i32) {
    %c0_i32 = arith.constant 0 : i32
    %c0_i32_0 = arith.constant 0 : i32
    return %arg0, %c0_i32, %arg1 : i32, i32, i32
  }
  func.func @transform_1(%arg0: i32, %arg1: i32, %arg2: i32) -> (i32, i32) {
    %c0_i32 = arith.constant 0 : i32
    %c0_i32_0 = arith.constant 0 : i32
    %c0_i32_1 = arith.constant 0 : i32
    return %c0_i32, %c0_i32_0 : i32, i32
  }
  func.func @transform_2(%arg0: i32, %arg1: i32, %arg2: i32) -> (i32, i32, i32) {
    %c0_i32 = arith.constant 0 : i32
    %c0_i32_0 = arith.constant 0 : i32
    return %arg0, %c0_i32, %arg2 : i32, i32, i32
  }
  func.func @transform_3(%arg0: i32, %arg1: i32, %arg2: i32) -> (i32, i32, i32) {
    %c0_i32 = arith.constant 0 : i32
    %c0_i32_0 = arith.constant 0 : i32
    return %arg0, %c0_i32, %arg2 : i32, i32, i32
  }
  func.func @transform_4(%arg0: i32, %arg1: i32, %arg2: i32) -> (i32, i32, i32) {
    %c0_i32 = arith.constant 0 : i32
    %c0_i32_0 = arith.constant 0 : i32
    return %arg0, %c0_i32, %arg1 : i32, i32, i32
  }
}

</mosaic_0001>

<llo_original>
// kernel: tpu_custom_call.1
$region0: #{tpu_custom_call.1}
  #allocation0 [shape = 'u32[]', space=smem, size = 0x4, offset = 0x4, fixed_abs, tag = 'smem constant byte address 0x4 - core index']
  #allocation1 [shape = 'u32[144,128]{1,0:T(1,128)}', space=vmem, size = 0x12000, scoped, tag = 'internal scratch']
  #allocation2 [shape = 'bf16[8,128]{1,0:T(8,128)(2,1)}', space=vmem, size = 0x800, scoped, tag = 'scratch operand']
  #allocation3 [shape = 'f32[1,128]{1,0:T(1,128)}', space=vmem, size = 0x200, scoped, tag = 'scratch operand']
  #allocation4 [shape = 'f32[16,128]{1,0:T(8,128)}', space=vmem, size = 0x2000, scoped, tag = 'scratch operand']
  %s0 = inlined_call_operand.hbm [shape: bf16[2,16,128], index: 0, kind: input, shape index: {}]
  %s1 = inlined_call_operand.hbm [shape: bf16[8,16], index: 1, kind: input, shape index: {}]
  %s2 = inlined_call_operand.hbm [shape: bf16[2,8,128], index: 2, kind: input, shape index: {}]
  %s3 = inlined_call_operand.hbm [shape: bf16[2,16,128], index: 3, kind: input, shape index: {}]
  %s4 = inlined_call_operand.hbm [shape: f32[2,8,128], index: 4, kind: output, shape index: {}]
  %s5 = sld [smem:[#allocation0]]
  $region73: #{tpu_custom_call.1} parent=0
    _
  %s7 = ssub.s32 1, %s5
  %s8 = scalar_select 0, %s7, %s5
  $region1: #{tpu_custom_call.1} parent=0
    #allocation5 [shape = 'u8[8192]{0}', space=vmem, size = 0x2000, scoped, tag = 'input window, operand 0']
    #allocation6 [shape = 's32[2]{0}', space=sflag, size = 0x8, scoped, tag = 'scoped memory for tpu_custom_call.1']
    #allocation7 [shape = 's32[2]{0}', space=sflag, size = 0x8, scoped, tag = 'scoped memory for tpu_custom_call.1']
    #allocation8 [shape = 'u8[2048]{0}', space=vmem, size = 0x800, scoped, tag = 'input window, operand 1, single buffered']
    #allocation9 [shape = 's32[1]{0}', space=sflag, size = 0x4, scoped, tag = 'scoped memory for tpu_custom_call.1']
    #allocation10 [shape = 'u8[4096]{0}', space=vmem, size = 0x1000, scoped, tag = 'input window, operand 2']
    #allocation11 [shape = 'u8[8192]{0}', space=vmem, size = 0x2000, scoped, tag = 'input window, operand 3']
    #allocation12 [shape = 'u8[8192]{0}', space=vmem, size = 0x2000, scoped, tag = 'output window, operand 0']
    %9 = vsyncpa [#allocation6], 0
    %s10 = scalar_lea.sflag [#allocation6], 1
    %11 = vsyncpa %s10, 0
    %12 = vsyncpa [#allocation9], 0
    %13 = vsyncpa [#allocation7], 0
    %s14 = scalar_lea.sflag [#allocation7], 1
    %15 = vsyncpa %s14, 0
    loop: start=0, step=1, limit=4
    $region2: #{tpu_custom_call.1} parent=1 // loop_pre_header
      _
    $region3: #{tpu_custom_call.1} parent=1 // loop_header
      %s17 = sphi 0, %s21
      %p18 = scmp.ge.s32.totalorder %s17, 4
      %s24 = sphi 0, %s43
      %s25 = sphi 0, %s39
      %s26 = sphi 0, %s35
      %s27 = sphi 0, %s24
      %s28 = sphi 0, %s25
      %s29 = sphi 0, %s26
      %s30 = sphi 0, %s27
      %s31 = sphi 0, %s28
      %s32 = sphi 0, %s29
      %s48 = sphi 0, %s50
      %s51 = sphi 0, %s48
      %s52 = sphi 0, %s51
      %s68 = sphi 0, %s52
      %s72 = sphi 0, %s72
      %s74 = sphi 0, %s72
      %s75 = sphi 0, %s74
      %s89 = sphi 0, %s75
      %s97 = sphi 0, %s99
      %s100 = sphi 0, %s97
      %s101 = sphi 0, %s100
      %s117 = sphi 0, %s101
      %s125 = sphi 0, %s127
      %s128 = sphi 0, %s125
      %s129 = sphi 0, %s128
      %s145 = sphi 0, %s129
      %s153 = sphi 0, %s155
      %s156 = sphi 0, %s153
      %s157 = sphi 0, %s156
      %s173 = sphi 0, %s157
    $region4: #{tpu_custom_call.1} parent=1 // loop_header_branch
      %20 = sbr.rel (%p18) target = $region8
    $region5: #{tpu_custom_call.1} parent=1 // loop_body
      %s22 = ssub.s32 %s17, 1
      %s23 = ssub.s32 %s17, 2
      %s33 = sadd.s32 1, %s26
      %p34 = scmp.ge.s32.totalorder %s33, 1
      %s35 = scalar_select %p34, 0, %s33
      %s36 = sadd.s32 1, %s25
      %s37 = scalar_select %p34, %s36, %s25
      %p38 = scmp.ge.s32.totalorder %s37, 1
      %s39 = scalar_select %p38, 0, %s37
      %s40 = sadd.s32 1, %s24
      %s41 = scalar_select %p38, %s40, %s24
      %p42 = scmp.ge.s32.totalorder %s41, 2
      %s43 = scalar_select %p42, 0, %s41
      %s44 = ssub.s32 %s24, %s43
      %s45 = ssub.s32 %s25, %s39
      %s46 = sor.u32 %s44, %s45
      %p47 = scmp.eq.s32.totalorder %s46, 0
      %s49 = sadd.s32 %s48, 1
      %s50 = scalar_select %p47, %s48, %s49
      %p53 = pneg %p47
      %p54 = scmp.eq.s32.totalorder %s17, 1
      %p55 = por %p53, %p54
      %p56 = scmp.ne.s32.totalorder %s48, %s51
      %p57 = scmp.eq.s32.totalorder %s17, 0
      %p58 = por %p56, %p57
      %p59 = scmp.ne.s32.totalorder %s48, %s51
      %p60 = scmp.eq.s32.totalorder %s22, 1
      %p61 = por %p59, %p60
      %p62 = scmp.ne.s32.totalorder %s51, %s52
      %p63 = scmp.eq.s32.totalorder %s22, 0
      %p64 = por %p62, %p63
      %p65 = scmp.ne.s32.totalorder %s51, %s52
      %p66 = scmp.eq.s32.totalorder %s23, 1
      %p67 = por %p65, %p66
      %p69 = scmp.ne.s32.totalorder %s52, %s68
      %p70 = scmp.eq.s32.totalorder %s23, 0
      %p71 = por %p69, %p70
      %s73 = sadd.s32 %s72, 1
      %p76 = scmp.eq.s32.totalorder %s17, 1
      %p77 = scmp.ne.s32.totalorder %s72, %s74
      %p78 = scmp.eq.s32.totalorder %s17, 0
      %p79 = por %p77, %p78
      %p80 = scmp.ne.s32.totalorder %s72, %s74
      %p81 = scmp.eq.s32.totalorder %s22, 1
      %p82 = por %p80, %p81
      %p83 = scmp.ne.s32.totalorder %s74, %s75
      %p84 = scmp.eq.s32.totalorder %s22, 0
      %p85 = por %p83, %p84
      %p86 = scmp.ne.s32.totalorder %s74, %s75
      %p87 = scmp.eq.s32.totalorder %s23, 1
      %p88 = por %p86, %p87
      %p90 = scmp.ne.s32.totalorder %s75, %s89
      %p91 = scmp.eq.s32.totalorder %s23, 0
      %p92 = por %p90, %p91
      %s93 = ssub.s32 %s24, %s43
      %s94 = ssub.s32 %s26, %s35
      %s95 = sor.u32 %s93, %s94
      %p96 = scmp.eq.s32.totalorder %s95, 0
      %s98 = sadd.s32 %s97, 1
      %s99 = scalar_select %p96, %s97, %s98
      %p102 = pneg %p96
      %p103 = scmp.eq.s32.totalorder %s17, 1
      %p104 = por %p102, %p103
      %p105 = scmp.ne.s32.totalorder %s97, %s100
      %p106 = scmp.eq.s32.totalorder %s17, 0
      %p107 = por %p105, %p106
      %p108 = scmp.ne.s32.totalorder %s97, %s100
      %p109 = scmp.eq.s32.totalorder %s22, 1
      %p110 = por %p108, %p109
      %p111 = scmp.ne.s32.totalorder %s100, %s101
      %p112 = scmp.eq.s32.totalorder %s22, 0
      %p113 = por %p111, %p112
      %p114 = scmp.ne.s32.totalorder %s100, %s101
      %p115 = scmp.eq.s32.totalorder %s23, 1
      %p116 = por %p114, %p115
      %p118 = scmp.ne.s32.totalorder %s101, %s117
      %p119 = scmp.eq.s32.totalorder %s23, 0
      %p120 = por %p118, %p119
      %s121 = ssub.s32 %s24, %s43
      %s122 = ssub.s32 %s26, %s35
      %s123 = sor.u32 %s121, %s122
      %p124 = scmp.eq.s32.totalorder %s123, 0
      %s126 = sadd.s32 %s125, 1
      %s127 = scalar_select %p124, %s125, %s126
      %p130 = pneg %p124
      %p131 = scmp.eq.s32.totalorder %s17, 1
      %p132 = por %p130, %p131
      %p133 = scmp.ne.s32.totalorder %s125, %s128
      %p134 = scmp.eq.s32.totalorder %s17, 0
      %p135 = por %p133, %p134
      %p136 = scmp.ne.s32.totalorder %s125, %s128
      %p137 = scmp.eq.s32.totalorder %s22, 1
      %p138 = por %p136, %p137
      %p139 = scmp.ne.s32.totalorder %s128, %s129
      %p140 = scmp.eq.s32.totalorder %s22, 0
      %p141 = por %p139, %p140
      %p142 = scmp.ne.s32.totalorder %s128, %s129
      %p143 = scmp.eq.s32.totalorder %s23, 1
      %p144 = por %p142, %p143
      %p146 = scmp.ne.s32.totalorder %s129, %s145
      %p147 = scmp.eq.s32.totalorder %s23, 0
      %p148 = por %p146, %p147
      %s149 = ssub.s32 %s24, %s43
      %s150 = ssub.s32 %s25, %s39
      %s151 = sor.u32 %s149, %s150
      %p152 = scmp.eq.s32.totalorder %s151, 0
      %s154 = sadd.s32 %s153, 1
      %s155 = scalar_select %p152, %s153, %s154
      %p158 = pneg %p152
      %p159 = scmp.eq.s32.totalorder %s17, 1
      %p160 = por %p158, %p159
      %p161 = scmp.ne.s32.totalorder %s153, %s156
      %p162 = scmp.eq.s32.totalorder %s17, 0
      %p163 = por %p161, %p162
      %p164 = scmp.ne.s32.totalorder %s153, %s156
      %p165 = scmp.eq.s32.totalorder %s22, 1
      %p166 = por %p164, %p165
      %p167 = scmp.ne.s32.totalorder %s156, %s157
      %p168 = scmp.eq.s32.totalorder %s22, 0
      %p169 = por %p167, %p168
      %p170 = scmp.ne.s32.totalorder %s156, %s157
      %p171 = scmp.eq.s32.totalorder %s23, 1
      %p172 = por %p170, %p171
      %p174 = scmp.ne.s32.totalorder %s157, %s173
      %p175 = scmp.eq.s32.totalorder %s23, 0
      %p176 = por %p174, %p175
      %p177 = scmp.le.s32.totalorder 1, %s17
      %p178 = scmp.lt.s32.totalorder %s17, 3
      %p179 = pnand %p177, %p178
      %p180 = pneg %p179
      // Predicated region
      $region9: #{tpu_custom_call.1} parent=5 // pred_check
        _
      $region10: #{tpu_custom_call.1} parent=5 // pred_check_branch
        %182 = sbr.rel (%p179) target = $region12
      $region11: #{tpu_custom_call.1} parent=5 // pred_region
        %s183 = ssub.s32 %s17, 1
        // Predicated region
        $region13: #{tpu_custom_call.1} parent=11 // pred_check
          %p184 = pneg %p85
        $region14: #{tpu_custom_call.1} parent=11 // pred_check_branch
          %186 = sbr.rel (%p184) target = $region16
        $region15: #{tpu_custom_call.1} parent=11 // pred_region
          %s188 = ssub.s32 64, 64
          %189 = vsyncadd [#allocation9], %s188
          %s191 = sshll.u32 [#allocation8], 4
          %s192 = int_to_ptr.vmem [resolvable:$true] %s191
          %194 = dma.hbm_to_vmem [thread:$0]  %s1, 64, %s192, [#allocation9]
        $region16: #{tpu_custom_call.1} parent=11 // pred_fallthru
          _
      $region12: #{tpu_custom_call.1} parent=5 // pred_fallthru
        _
      %p195 = scmp.lt.s32.totalorder %s17, 2
      // Predicated region
      $region17: #{tpu_custom_call.1} parent=5 // pred_check
        %p196 = pneg %p195
      $region18: #{tpu_custom_call.1} parent=5 // pred_check_branch
        %198 = sbr.rel (%p196) target = $region20
      $region19: #{tpu_custom_call.1} parent=5 // pred_region
        // Predicated region
        $region21: #{tpu_custom_call.1} parent=19 // pred_check
          %p199 = pneg %p58
        $region22: #{tpu_custom_call.1} parent=19 // pred_check_branch
          %201 = sbr.rel (%p199) target = $region24
        $region23: #{tpu_custom_call.1} parent=19 // pred_region
          %s202 = sand.u32 %s17, 1
          %s203 = scalar_lea.sflag [#allocation6], %s202
          %s204 = sand.u32 %s48, 1
          %s205 = smul.addr %s204, 8
          %s206 = scalar_lea.vmem [#allocation5], %s205
          %s208 = ssub.s32 128, 128
          %209 = vsyncadd %s203, %s208
          %s210 = smul.addr %s24, 2
          %s211 = sadd.s32 %s25, %s210
          %s212 = smul.addr %s211, 64
          %s213 = scalar_lea.hbm %s0, %s212
          %s214 = sshll.u32 %s206, 4
          %s215 = int_to_ptr.vmem [resolvable:$true] %s214
          %220 = dma.hbm_to_vmem [thread:$0]  %s213, 128, %s215, %s203, 64, 64, 4
        $region24: #{tpu_custom_call.1} parent=19 // pred_fallthru
          _
        // Predicated region
        $region25: #{tpu_custom_call.1} parent=19 // pred_check
          %p221 = pneg %p107
        $region26: #{tpu_custom_call.1} parent=19 // pred_check_branch
          %223 = sbr.rel (%p221) target = $region28
        $region27: #{tpu_custom_call.1} parent=19 // pred_region
          %s224 = sand.u32 %s17, 1
          %s225 = scalar_lea.sflag [#allocation6], %s224
          %s226 = sand.u32 %s97, 1
          %s227 = smul.addr %s226, 4
          %s228 = scalar_lea.vmem [#allocation10], %s227
          %s230 = ssub.s32 64, 64
          %231 = vsyncadd %s225, %s230
          %s232 = sadd.s32 %s26, %s24
          %s233 = smul.addr %s232, 64
          %s234 = scalar_lea.hbm %s2, %s233
          %s236 = sshll.u32 %s228, 4
          %s237 = int_to_ptr.vmem [resolvable:$true] %s236
          %239 = dma.hbm_to_vmem [thread:$0]  %s234, 64, %s237, %s225
        $region28: #{tpu_custom_call.1} parent=19 // pred_fallthru
          _
        // Predicated region
        $region29: #{tpu_custom_call.1} parent=19 // pred_check
          %p240 = pneg %p135
        $region30: #{tpu_custom_call.1} parent=19 // pred_check_branch
          %242 = sbr.rel (%p240) target = $region32
        $region31: #{tpu_custom_call.1} parent=19 // pred_region
          %s243 = sand.u32 %s17, 1
          %s244 = scalar_lea.sflag [#allocation6], %s243
          %s245 = sand.u32 %s125, 1
          %s246 = smul.addr %s245, 8
          %s247 = scalar_lea.vmem [#allocation11], %s246
          %s249 = ssub.s32 128, 128
          %250 = vsyncadd %s244, %s249
          %s251 = smul.addr %s24, 2
          %s252 = sadd.s32 %s26, %s251
          %s253 = smul.addr %s252, 64
          %s254 = scalar_lea.hbm %s3, %s253
          %s255 = sshll.u32 %s247, 4
          %s256 = int_to_ptr.vmem [resolvable:$true] %s255
          %261 = dma.hbm_to_vmem [thread:$0]  %s254, 128, %s256, %s244, 64, 64, 4
        $region32: #{tpu_custom_call.1} parent=19 // pred_fallthru
          _
      $region20: #{tpu_custom_call.1} parent=5 // pred_fallthru
        _
      %p262 = scmp.le.s32.totalorder 1, %s17
      %p263 = scmp.lt.s32.totalorder %s17, 3
      %p264 = pnand %p262, %p263
      %p265 = pneg %p264
      // Predicated region
      $region33: #{tpu_custom_call.1} parent=5 // pred_check
        _
      $region34: #{tpu_custom_call.1} parent=5 // pred_check_branch
        %267 = sbr.rel (%p264) target = $region36
      $region35: #{tpu_custom_call.1} parent=5 // pred_region
        %s268 = ssub.s32 %s17, 1
        %s269 = sand.u32 %s22, 1
        %s270 = scalar_lea.sflag [#allocation6], %s269
        %s271 = sand.u32 %s51, 1
        %s272 = smul.addr %s271, 8
        %s273 = scalar_lea.vmem [#allocation5], %s272
        // Predicated region
        $region37: #{tpu_custom_call.1} parent=35 // pred_check
          %p274 = pneg %p64
        $region38: #{tpu_custom_call.1} parent=35 // pred_check_branch
          %276 = sbr.rel (%p274) target = $region40
        $region39: #{tpu_custom_call.1} parent=35 // pred_region
          %277 = dma.done %s270, 128
        $region40: #{tpu_custom_call.1} parent=35 // pred_fallthru
          _
        // Predicated region
        $region41: #{tpu_custom_call.1} parent=35 // pred_check
          %p278 = pneg %p85
        $region42: #{tpu_custom_call.1} parent=35 // pred_check_branch
          %280 = sbr.rel (%p278) target = $region44
        $region43: #{tpu_custom_call.1} parent=35 // pred_region
          %281 = dma.done [#allocation9], 64
        $region44: #{tpu_custom_call.1} parent=35 // pred_fallthru
          _
        %s282 = sand.u32 %s22, 1
        %s283 = scalar_lea.sflag [#allocation6], %s282
        %s284 = sand.u32 %s100, 1
        %s285 = smul.addr %s284, 4
        %s286 = scalar_lea.vmem [#allocation10], %s285
        // Predicated region
        $region45: #{tpu_custom_call.1} parent=35 // pred_check
          %p287 = pneg %p113
        $region46: #{tpu_custom_call.1} parent=35 // pred_check_branch
          %289 = sbr.rel (%p287) target = $region48
        $region47: #{tpu_custom_call.1} parent=35 // pred_region
          %290 = dma.done %s283, 64
        $region48: #{tpu_custom_call.1} parent=35 // pred_fallthru
          _
        %s291 = sand.u32 %s22, 1
        %s292 = scalar_lea.sflag [#allocation6], %s291
        %s293 = sand.u32 %s128, 1
        %s294 = smul.addr %s293, 8
        %s295 = scalar_lea.vmem [#allocation11], %s294
        // Predicated region
        $region49: #{tpu_custom_call.1} parent=35 // pred_check
          %p296 = pneg %p141
        $region50: #{tpu_custom_call.1} parent=35 // pred_check_branch
          %298 = sbr.rel (%p296) target = $region52
        $region51: #{tpu_custom_call.1} parent=35 // pred_region
          %299 = dma.done %s292, 128
        $region52: #{tpu_custom_call.1} parent=35 // pred_fallthru
          _
        %s300 = sand.u32 %s22, 1
        %s301 = scalar_lea.sflag [#allocation6], %s300
        %s302 = sand.u32 %s51, 1
        %s303 = smul.addr %s302, 8
        %s304 = scalar_lea.vmem [#allocation5], %s303
        %p305 = pneg %p64
        %p306 = pneg %p61
        %p307 = pneg %p85
        %p308 = pneg %p82
        %s309 = sand.u32 %s22, 1
        %s310 = scalar_lea.sflag [#allocation6], %s309
        %s311 = sand.u32 %s100, 1
        %s312 = smul.addr %s311, 4
        %s313 = scalar_lea.vmem [#allocation10], %s312
        %p314 = pneg %p113
        %p315 = pneg %p110
        %s316 = sand.u32 %s22, 1
        %s317 = scalar_lea.sflag [#allocation6], %s316
        %s318 = sand.u32 %s128, 1
        %s319 = smul.addr %s318, 8
        %s320 = scalar_lea.vmem [#allocation11], %s319
        %p321 = pneg %p141
        %p322 = pneg %p138
        %p323 = pneg %p169
        %p324 = pneg %p166
        %s325 = sand.u32 %s156, 1
        %s326 = scalar_lea.sflag [#allocation7], %s325
        %s327 = sand.u32 %s156, 1
        %s328 = smul.addr %s327, 8
        %s329 = scalar_lea.vmem [#allocation12], %s328
        %p331 = scmp.eq.s32.totalorder %s29, 0
        // Predicated region
        $region53: #{tpu_custom_call.1} parent=35 // pred_check
          %p332 = pneg %p331
        $region54: #{tpu_custom_call.1} parent=35 // pred_check_branch
          %334 = sbr.rel (%p332) target = $region56
        $region55: #{tpu_custom_call.1} parent=35 // pred_region
          %v335 = vld [vmem:[#allocation8] sm:$0xf]
          %v336 = vld [vmem:[%s273] sm:$0xf]
          %v337 = vld [vmem:[%s273 + $0x4] sm:$0xf]
          %v340 = vunpack.c.l.b16 %v336
          %v341 = vunpack.c.l.b16 %v337
          %v342 = vpack.c.b16 %v341, %v340
          %vm344 = vcmask 130048
          %v346 = vsel %vm344, %v335, 0
          %348 = vmatprep.subr.bf16.mxu0 0
          %349 = vmatpush1.bf16.msra.mxu0 %v342
          %350 = vmatprep.subr.bf16.mxu0 0
          %351 = vmatpush1.bf16.msra.mxu0 0
          %352 = vmatprep.subr.bf16.mxu0 0
          %353 = vmatpush1.bf16.msra.mxu0 0
          %354 = vmatprep.subr.bf16.mxu0 0
          %355 = vmatpush1.bf16.msra.mxu0 0
          %356 = vmatprep.subr.bf16.mxu0 0
          %357 = vmatpush1.bf16.msra.mxu0 0
          %358 = vmatprep.subr.bf16.mxu0 0
          %359 = vmatpush1.bf16.msra.mxu0 0
          %360 = vmatprep.subr.bf16.mxu0 0
          %361 = vmatpush1.bf16.msra.mxu0 0
          %362 = vmatprep.subr.bf16.mxu0 0
          %363 = vmatpush1.bf16.msra.mxu0 0
          %364 = vmatprep.subr.bf16.mxu0 0
          %365 = vmatpush1.bf16.msra.mxu0 0
          %366 = vmatprep.subr.bf16.mxu0 0
          %367 = vmatpush1.bf16.msra.mxu0 0
          %368 = vmatprep.subr.bf16.mxu0 0
          %369 = vmatpush1.bf16.msra.mxu0 0
          %370 = vmatprep.subr.bf16.mxu0 0
          %371 = vmatpush1.bf16.msra.mxu0 0
          %372 = vmatprep.subr.bf16.mxu0 0
          %373 = vmatpush1.bf16.msra.mxu0 0
          %374 = vmatprep.subr.bf16.mxu0 0
          %375 = vmatpush1.bf16.msra.mxu0 0
          %376 = vmatprep.subr.bf16.mxu0 0
          %377 = vmatpush1.bf16.msra.mxu0 0
          %378 = vmatprep.subr.bf16.mxu0 0
          %379 = vmatpush1.bf16.msra.mxu0 0
          %380 = vmatprep.mubr.bf16.mxu0 0
          %381 = vmatmul.mubr.bf16.gmra.mrb[0].mxu0 %v346
          %v382 = vpop.f32.mrb[0].mxu0
          %v383 = vadd.f32 0.0, %v382
          %v384 = vpop.f32.mrb[0].mxu0
          %v385 = vpop.f32.mrb[0].mxu0
          %v386 = vpop.f32.mrb[0].mxu0
          %387 = vdwg.mxu0
          %v388 = vmul.f32 %v383, 0.25
          %v389 = vpack.c.bf16 %v388, %v388
          %390 = vst [vmem:[#allocation2] sm:$0xf] %v389
          %391 = vst [vmem:[#allocation3] sm:$0x1] -inf
          %392 = vst [vmem:[#allocation4] sm:$0xff] 0.0
          %393 = vst [vmem:[#allocation4 + $0x8] sm:$0xff] 0.0
        $region56: #{tpu_custom_call.1} parent=35 // pred_fallthru
          _
        %v394 = vld [vmem:[%s286] sm:$0xf]
        %v395 = vld [vmem:[#allocation2] sm:$0xf]
        %396 = vxpose.xlu0.c.b16.start [1/8] %v394, 128
        %397 = vxpose.xlu0.c.b16.cont [2/8] 0, 128
        %398 = vxpose.xlu0.c.b16.cont [3/8] 0, 128
        %399 = vxpose.xlu0.c.b16.cont [4/8] 0, 128
        %400 = vxpose.xlu0.c.b16.cont [5/8] 0, 128
        %401 = vxpose.xlu0.c.b16.cont [6/8] 0, 128
        %402 = vxpose.xlu0.c.b16.cont [7/8] 0, 128
        %403 = vxpose.xlu0.c.b16.end [8/8] 0, 128
        %v404 = vpop.trf.xlu0
        %v405 = vpop.trf.xlu0
        %v406 = vpop.trf.xlu0
        %v407 = vpop.trf.xlu0
        %v408 = vpop.trf.xlu0
        %v409 = vpop.trf.xlu0
        %v410 = vpop.trf.xlu0
        %v411 = vpop.trf.xlu0
        %vm412 = vcmask 64512
        %v414 = vsel %vm412, %v404, 0
        %v417 = vsel %vm412, %v405, 0
        %v420 = vsel %vm412, %v406, 0
        %v423 = vsel %vm412, %v407, 0
        %v426 = vsel %vm412, %v408, 0
        %v429 = vsel %vm412, %v409, 0
        %v432 = vsel %vm412, %v410, 0
        %v435 = vsel %vm412, %v411, 0
        %vm437 = vcmask 1043456
        %v439 = vsel %vm437, %v395, 0
        %441 = vmatprep.subr.bf16.mxu0 0
        %442 = vmatpush1.bf16.msra.mxu0 %v439
        %443 = vmatprep.subr.bf16.mxu0 0
        %444 = vmatpush1.bf16.msra.mxu0 0
        %445 = vmatprep.subr.bf16.mxu0 0
        %446 = vmatpush1.bf16.msra.mxu0 0
        %447 = vmatprep.subr.bf16.mxu0 0
        %448 = vmatpush1.bf16.msra.mxu0 0
        %449 = vmatprep.subr.bf16.mxu0 0
        %450 = vmatpush1.bf16.msra.mxu0 0
        %451 = vmatprep.subr.bf16.mxu0 0
        %452 = vmatpush1.bf16.msra.mxu0 0
        %453 = vmatprep.subr.bf16.mxu0 0
        %454 = vmatpush1.bf16.msra.mxu0 0
        %455 = vmatprep.subr.bf16.mxu0 0
        %456 = vmatpush1.bf16.msra.mxu0 0
        %457 = vmatprep.subr.bf16.mxu0 0
        %458 = vmatpush1.bf16.msra.mxu0 0
        %459 = vmatprep.subr.bf16.mxu0 0
        %460 = vmatpush1.bf16.msra.mxu0 0
        %461 = vmatprep.subr.bf16.mxu0 0
        %462 = vmatpush1.bf16.msra.mxu0 0
        %463 = vmatprep.subr.bf16.mxu0 0
        %464 = vmatpush1.bf16.msra.mxu0 0
        %465 = vmatprep.subr.bf16.mxu0 0
        %466 = vmatpush1.bf16.msra.mxu0 0
        %467 = vmatprep.subr.bf16.mxu0 0
        %468 = vmatpush1.bf16.msra.mxu0 0
        %469 = vmatprep.subr.bf16.mxu0 0
        %470 = vmatpush1.bf16.msra.mxu0 0
        %471 = vmatprep.subr.bf16.mxu0 0
        %472 = vmatpush1.bf16.msra.mxu0 0
        %473 = vmatprep.mubr.bf16.mxu0 0
        %474 = vmatmul.mubr.bf16.gmra.mrb[0].mxu0 %v414
        %v475 = vpop.f32.mrb[0].mxu0
        %v476 = vadd.f32 0.0, %v475
        %v477 = vpop.f32.mrb[0].mxu0
        %v478 = vpop.f32.mrb[0].mxu0
        %v479 = vadd.f32 0.0, %v478
        %v480 = vpop.f32.mrb[0].mxu0
        %481 = vmatprep.mubr.bf16.mxu0 0
        %482 = vmatmul.mubr.bf16.gmra.mrb[0].mxu0 %v417
        %v483 = vpop.f32.mrb[0].mxu0
        %v484 = vadd.f32 0.0, %v483
        %v485 = vpop.f32.mrb[0].mxu0
        %v486 = vpop.f32.mrb[0].mxu0
        %v487 = vadd.f32 0.0, %v486
        %v488 = vpop.f32.mrb[0].mxu0
        %489 = vmatprep.mubr.bf16.mxu0 0
        %490 = vmatmul.mubr.bf16.gmra.mrb[0].mxu0 %v420
        %v491 = vpop.f32.mrb[0].mxu0
        %v492 = vadd.f32 0.0, %v491
        %v493 = vpop.f32.mrb[0].mxu0
        %v494 = vpop.f32.mrb[0].mxu0
        %v495 = vadd.f32 0.0, %v494
        %v496 = vpop.f32.mrb[0].mxu0
        %497 = vmatprep.mubr.bf16.mxu0 0
        %498 = vmatmul.mubr.bf16.gmra.mrb[0].mxu0 %v423
        %v499 = vpop.f32.mrb[0].mxu0
        %v500 = vadd.f32 0.0, %v499
        %v501 = vpop.f32.mrb[0].mxu0
        %v502 = vpop.f32.mrb[0].mxu0
        %v503 = vadd.f32 0.0, %v502
        %v504 = vpop.f32.mrb[0].mxu0
        %505 = vmatprep.mubr.bf16.mxu0 0
        %506 = vmatmul.mubr.bf16.gmra.mrb[0].mxu0 %v426
        %v507 = vpop.f32.mrb[0].mxu0
        %v508 = vadd.f32 0.0, %v507
        %v509 = vpop.f32.mrb[0].mxu0
        %v510 = vpop.f32.mrb[0].mxu0
        %v511 = vadd.f32 0.0, %v510
        %v512 = vpop.f32.mrb[0].mxu0
        %513 = vmatprep.mubr.bf16.mxu0 0
        %514 = vmatmul.mubr.bf16.gmra.mrb[0].mxu0 %v429
        %v515 = vpop.f32.mrb[0].mxu0
        %v516 = vadd.f32 0.0, %v515
        %v517 = vpop.f32.mrb[0].mxu0
        %v518 = vpop.f32.mrb[0].mxu0
        %v519 = vadd.f32 0.0, %v518
        %v520 = vpop.f32.mrb[0].mxu0
        %521 = vmatprep.mubr.bf16.mxu0 0
        %522 = vmatmul.mubr.bf16.gmra.mrb[0].mxu0 %v432
        %v523 = vpop.f32.mrb[0].mxu0
        %v524 = vadd.f32 0.0, %v523
        %v525 = vpop.f32.mrb[0].mxu0
        %v526 = vpop.f32.mrb[0].mxu0
        %v527 = vadd.f32 0.0, %v526
        %v528 = vpop.f32.mrb[0].mxu0
        %529 = vmatprep.mubr.bf16.mxu0 0
        %530 = vmatmul.mubr.bf16.gmra.mrb[0].mxu0 %v435
        %v531 = vpop.f32.mrb[0].mxu0
        %v532 = vadd.f32 0.0, %v531
        %v533 = vpop.f32.mrb[0].mxu0
        %v534 = vpop.f32.mrb[0].mxu0
        %v535 = vadd.f32 0.0, %v534
        %v536 = vpop.f32.mrb[0].mxu0
        %537 = vdwg.mxu0
        %v538 = vld [vmem:[#allocation3] sm:$0x1]
        %v539 = vmax.f32 %v476, %v492
        %v540 = vmax.f32 %v479, %v495
        %v541 = vmax.f32 %v484, %v500
        %v542 = vmax.f32 %v487, %v503
        %v543 = vmax.f32 %v539, %v508
        %v544 = vmax.f32 %v540, %v511
        %v545 = vmax.f32 %v541, %v516
        %v546 = vmax.f32 %v542, %v519
        %v547 = vmax.f32 %v543, %v524
        %v548 = vmax.f32 %v544, %v527
        %v549 = vmax.f32 %v545, %v532
        %v550 = vmax.f32 %v546, %v535
        %v551 = vmax.f32 %v547, %v548
        %v552 = vmax.f32 %v549, %v550
        %v553 = vmax.f32 %v551, %v552
        %v554 = vrot.slane %v553, 4
        %v555 = vmax.f32 %v553, %v554
        %v556 = vrot.slane %v555, 2
        %v557 = vmax.f32 %v555, %v556
        %v558 = vrot.slane %v557, 1
        %v559 = vmax.f32 %v557, %v558
        %v560 = vmax.f32 %v538, %v559
        %v561 = vsub.f32 %v538, %v560
        %v562 = vmul.f32 %v561, 1.442695
        %v563 = vpow.pop %v562
        %v565 = vlaneseq
        %v566 = vshrl.u32 %v565, 7
        %v567 = vsub.s32 0, %v566
        %v568 = vrot.slane %v560, %v567
        %v570 = vsub.f32 %v476, %v568
        %v571 = vsub.f32 %v479, %v568
        %v572 = vsub.f32 %v484, %v568
        %v573 = vsub.f32 %v487, %v568
        %v574 = vsub.f32 %v492, %v568
        %v575 = vsub.f32 %v495, %v568
        %v576 = vsub.f32 %v500, %v568
        %v577 = vsub.f32 %v503, %v568
        %v578 = vsub.f32 %v508, %v568
        %v579 = vsub.f32 %v511, %v568
        %v580 = vsub.f32 %v516, %v568
        %v581 = vsub.f32 %v519, %v568
        %v582 = vsub.f32 %v524, %v568
        %v583 = vsub.f32 %v527, %v568
        %v584 = vsub.f32 %v532, %v568
        %v585 = vsub.f32 %v535, %v568
        %v586 = vpack.c.bf16 %v571, %v570
        %v587 = vpack.c.bf16 %v573, %v572
        %v588 = vpack.c.bf16 %v575, %v574
        %v589 = vpack.c.bf16 %v577, %v576
        %v590 = vpack.c.bf16 %v579, %v578
        %v591 = vpack.c.bf16 %v581, %v580
        %v592 = vpack.c.bf16 %v583, %v582
        %v593 = vpack.c.bf16 %v585, %v584
        %v595 = vmul.bf16 %v586, 1069105081
        %v596 = vpow.bf16.pop %v595
        %v598 = vmul.bf16 %v587, 1069105081
        %v599 = vpow.bf16.pop %v598
        %v601 = vmul.bf16 %v588, 1069105081
        %v602 = vpow.bf16.pop %v601
        %v604 = vmul.bf16 %v589, 1069105081
        %v605 = vpow.bf16.pop %v604
        %v607 = vmul.bf16 %v590, 1069105081
        %v608 = vpow.bf16.pop %v607
        %v610 = vmul.bf16 %v591, 1069105081
        %v611 = vpow.bf16.pop %v610
        %v613 = vmul.bf16 %v592, 1069105081
        %v614 = vpow.bf16.pop %v613
        %v616 = vmul.bf16 %v593, 1069105081
        %v617 = vpow.bf16.pop %v616
        %v618 = vld [vmem:[%s295] sm:$0xf]
        %v619 = vld [vmem:[%s295 + $0x4] sm:$0xf]
        %v622 = vunpack.c.l.b16 %v618
        %v623 = vunpack.c.l.b16 %v619
        %v624 = vpack.c.b16 %v623, %v622
        %626 = vmatprep.subr.bf16.mxu0 0
        %627 = vmatpush1.bf16.msra.mxu0 %v596
        %628 = vmatprep.subr.bf16.mxu0 0
        %629 = vmatpush1.bf16.msra.mxu0 %v599
        %630 = vmatprep.subr.bf16.mxu0 0
        %631 = vmatpush1.bf16.msra.mxu0 %v602
        %632 = vmatprep.subr.bf16.mxu0 0
        %633 = vmatpush1.bf16.msra.mxu0 %v605
        %634 = vmatprep.subr.bf16.mxu0 0
        %635 = vmatpush1.bf16.msra.mxu0 %v608
        %636 = vmatprep.subr.bf16.mxu0 0
        %637 = vmatpush1.bf16.msra.mxu0 %v611
        %638 = vmatprep.subr.bf16.mxu0 0
        %639 = vmatpush1.bf16.msra.mxu0 %v614
        %640 = vmatprep.subr.bf16.mxu0 0
        %641 = vmatpush1.bf16.msra.mxu0 %v617
        %642 = vmatprep.subr.bf16.mxu0 0
        %643 = vmatpush1.bf16.msra.mxu0 0
        %644 = vmatprep.subr.bf16.mxu0 0
        %645 = vmatpush1.bf16.msra.mxu0 0
        %646 = vmatprep.subr.bf16.mxu0 0
        %647 = vmatpush1.bf16.msra.mxu0 0
        %648 = vmatprep.subr.bf16.mxu0 0
        %649 = vmatpush1.bf16.msra.mxu0 0
        %650 = vmatprep.subr.bf16.mxu0 0
        %651 = vmatpush1.bf16.msra.mxu0 0
        %652 = vmatprep.subr.bf16.mxu0 0
        %653 = vmatpush1.bf16.msra.mxu0 0
        %654 = vmatprep.subr.bf16.mxu0 0
        %655 = vmatpush1.bf16.msra.mxu0 0
        %656 = vmatprep.subr.bf16.mxu0 0
        %657 = vmatpush1.bf16.msra.mxu0 0
        %658 = vmatprep.mubr.bf16.mxu0 0
        %659 = vmatmul.mubr.bf16.gmra.mrb[0].mxu0 %v624
        %v660 = vpop.f32.mrb[0].mxu0
        %v661 = vadd.f32 0.0, %v660
        %v662 = vpop.f32.mrb[0].mxu0
        %v663 = vpop.f32.mrb[0].mxu0
        %v664 = vadd.f32 0.0, %v663
        %v665 = vpop.f32.mrb[0].mxu0
        %666 = vdwg.mxu0
        %v667 = vld [vmem:[#allocation4] sm:$0xff]
        %v668 = vld [vmem:[#allocation4 + $0x8] sm:$0xff]
        %v670 = vlaneseq
        %v671 = vshrl.u32 %v670, 7
        %v672 = vsub.s32 0, %v671
        %v673 = vrot.slane %v563, %v672
        %v675 = vmul.f32 %v667, %v673
        %v676 = vmul.f32 %v668, %v673
        %v677 = vadd.f32 %v675, %v661
        %v678 = vadd.f32 %v676, %v664
        %679 = vst [vmem:[#allocation4] sm:$0xff] %v677
        %680 = vst [vmem:[#allocation4 + $0x8] sm:$0xff] %v678
        %681 = vst [vmem:[#allocation3] sm:$0x1] %v560
        // Predicated region
        $region57: #{tpu_custom_call.1} parent=35 // pred_check
          %p682 = pneg %p331
        $region58: #{tpu_custom_call.1} parent=35 // pred_check_branch
          %684 = sbr.rel (%p682) target = $region60
        $region59: #{tpu_custom_call.1} parent=35 // pred_region
          %v685 = vld [vmem:[#allocation4] sm:$0xff]
          %v686 = vld [vmem:[#allocation4 + $0x8] sm:$0xff]
          %v687 = vrcp.pop %v686
          %v688 = vlaneseq
          %v689 = vshrl.u32 %v688, 7
          %v690 = vsub.s32 0, %v689
          %v691 = vrot.slane %v687, %v690
          %v692 = vmul.f32 %v685, %v691
          %693 = vst [vmem:[%s329] sm:$0xff] %v692
        $region60: #{tpu_custom_call.1} parent=35 // pred_fallthru
          _
        %s694 = sand.u32 %s156, 1
        %s695 = scalar_lea.sflag [#allocation7], %s694
        %s696 = sand.u32 %s156, 1
        %s697 = smul.addr %s696, 8
        %s698 = scalar_lea.vmem [#allocation12], %s697
        // Predicated region
        $region61: #{tpu_custom_call.1} parent=35 // pred_check
          %p699 = pneg %p166
        $region62: #{tpu_custom_call.1} parent=35 // pred_check_branch
          %701 = sbr.rel (%p699) target = $region64
        $region63: #{tpu_custom_call.1} parent=35 // pred_region
          %s703 = ssub.s32 128, 128
          %704 = vsyncadd %s695, %s703
          %s705 = sadd.s32 %s28, %s27
          %s706 = smul.addr %s705, 128
          %s707 = scalar_lea.hbm %s4, %s706
          %s709 = sshll.u32 %s698, 4
          %s710 = int_to_ptr.vmem [resolvable:$true] %s709
          %712 = dma.vmem_to_hbm [thread:$0]  %s710, 128, %s707, %s695
        $region64: #{tpu_custom_call.1} parent=35 // pred_fallthru
          _
      $region36: #{tpu_custom_call.1} parent=5 // pred_fallthru
        _
      %p713 = scmp.le.s32.totalorder 2, %s17
      // Predicated region
      $region65: #{tpu_custom_call.1} parent=5 // pred_check
        %p714 = pneg %p713
      $region66: #{tpu_custom_call.1} parent=5 // pred_check_branch
        %716 = sbr.rel (%p714) target = $region68
      $region67: #{tpu_custom_call.1} parent=5 // pred_region
        %s717 = ssub.s32 %s17, 2
        // Predicated region
        $region69: #{tpu_custom_call.1} parent=67 // pred_check
          %p718 = pneg %p172
        $region70: #{tpu_custom_call.1} parent=67 // pred_check_branch
          %720 = sbr.rel (%p718) target = $region72
        $region71: #{tpu_custom_call.1} parent=67 // pred_region
          %s721 = sand.u32 %s157, 1
          %s722 = scalar_lea.sflag [#allocation7], %s721
          %s723 = sand.u32 %s157, 1
          %s724 = smul.addr %s723, 8
          %s725 = scalar_lea.vmem [#allocation12], %s724
          %726 = dma.done %s722, 128
        $region72: #{tpu_custom_call.1} parent=67 // pred_fallthru
          _
      $region68: #{tpu_custom_call.1} parent=5 // pred_fallthru
        _
    $region6: #{tpu_custom_call.1} parent=1 // loop_footer
      %s21 = sadd.s32 1, %s17
    $region7: #{tpu_custom_call.1} parent=1 // loop_footer_branch
      %16 = sbr.rel target = $region3
    $region8: #{tpu_custom_call.1} parent=1 // loop_exit
      _
    %727 = vsyncpa [#allocation6], 1
    %s728 = scalar_lea.sflag [#allocation6], 1
    %729 = vsyncpa %s728, 1
    %730 = vsyncpa [#allocation9], 1
    %731 = vsyncpa [#allocation7], 1
    %s732 = scalar_lea.sflag [#allocation7], 1
    %733 = vsyncpa %s732, 1

</llo_original>
